<compile_context>
chip_gen: v7x
topology: tpu7x:2x2x1
jax: 0.10.0
libtpu: 0.0.40
codegen_flags: <defaults>
</compile_context>

<pallas_src>
import math

import jax
import jax.numpy as jnp
from jax.experimental import pallas as pl
from jax.experimental.pallas import tpu as pltpu


def mlp_kernel(x_ref, w1_ref, b1_ref, w2_ref, b2_ref, w3_ref, b3_ref, o_ref):
    cdt = w1_ref.dtype                       # bf16 (fast path) or f32 (exact path)
    x = x_ref[...].astype(cdt)               # in-kernel cast: VPU filler, no extra HBM pass
    # Layer 1: Linear + ReLU (f32 MXU accumulation; f32 epilogue)
    h1 = jnp.dot(x, w1_ref[...], preferred_element_type=jnp.float32)
    h1 = jnp.maximum(h1 + b1_ref[...], 0.0)
    # Layer 2: Linear + ReLU
    h2 = jnp.dot(h1.astype(cdt), w2_ref[...], preferred_element_type=jnp.float32)
    h2 = jnp.maximum(h2 + b2_ref[...], 0.0)
    # Layer 3: Linear (no activation); unpadded (TB, out_dim) store.
    out = jnp.dot(h2.astype(cdt), w3_ref[...], preferred_element_type=jnp.float32)
    o_ref[...] = (out + b3_ref[...]).astype(o_ref.dtype)


def prepare_params(params, *, use_bf16=True):
    """One-time param prep (hoisted out of the per-call path).

    Casts weights to the matmul operand dtype and zero-pads the hidden dim up
    to a multiple of 128 so h1/h2 vregs are full-lane and the MXU N/K dims are
    well filled. Zero padding is exact: padded h columns are ReLU(0 + 0) = 0
    and multiply against zero-padded rows downstream.
    """
    cdt = jnp.bfloat16 if use_bf16 else jnp.float32
    hidden = params["w1"].shape[1]
    hid_p = max(128, ((hidden + 127) // 128) * 128)
    ph = hid_p - hidden

    w1 = jnp.pad(params["w1"], ((0, 0), (0, ph))).astype(cdt)
    b1 = jnp.pad(params["b1"], ((0, 0), (0, ph))).astype(jnp.float32)
    w2 = jnp.pad(params["w2"], ((0, ph), (0, ph))).astype(cdt)
    b2 = jnp.pad(params["b2"], ((0, 0), (0, ph))).astype(jnp.float32)
    w3 = jnp.pad(params["w3"], ((0, ph), (0, 0))).astype(cdt)
    b3 = params["b3"].astype(jnp.float32)
    return {"w1": w1, "b1": b1, "w2": w2, "b2": b2, "w3": w3, "b3": b3}


def _pick_batch_tile(B, block_b):
    """Batch tile: big tiles amortize per-step overhead, but keep >=2 grid
    steps when possible so pipelining and v7x megacore sharding engage."""
    if B <= 8:
        return B                                   # full-array block (legal, any size)
    TB = min(block_b, B)
    if TB >= B:
        TB = max(8, (((B + 1) // 2) // 8) * 8)     # ~B/2, multiple of 8 -> >=2 steps
    else:
        TB = max(8, (TB // 8) * 8)
    return TB


def mlp_forward(x, prepped, *, block_b=2048, out_dtype=jnp.float32):
    """x: (B, in_dim) f32. prepped: output of prepare_params()."""
    B, in_dim = x.shape
    out_dim = prepped["w3"].shape[1]

    TB = _pick_batch_tile(B, block_b)
    grid = (pl.cdiv(B, TB),)

    # Weights/biases: full-array blocks with a constant index_map -> DMA'd once
    # and kept resident in VMEM across all batch tiles.
    def resident(a):
        return pl.BlockSpec(a.shape, lambda i: (0,) * a.ndim)

    return pl.pallas_call(
        mlp_kernel,
        out_shape=jax.ShapeDtypeStruct((B, out_dim), out_dtype),
        grid=grid,
        in_specs=[
            # x tiled over batch; in_dim equals the full last dim -> legal block.
            pl.BlockSpec((TB, in_dim), lambda i: (i, 0)),
            resident(prepped["w1"]), resident(prepped["b1"]),
            resident(prepped["w2"]), resident(prepped["b2"]),
            resident(prepped["w3"]), resident(prepped["b3"]),
        ],
        # out_dim (=8) equals the full last dim -> legal unpadded block; the few
        # masked vst.msk stores are not the binding slot in this mem-bound kernel.
        out_specs=pl.BlockSpec((TB, out_dim), lambda i: (i, 0)),
        compiler_params=pltpu.CompilerParams(
            dimension_semantics=("parallel",),   # megacore-shardable batch axis (v7x)
            vmem_limit_bytes=32 * 1024 * 1024,   # ample: resident weights ~50 KB,
                                                 # double-buffered x/out tiles < 1 MiB
        ),
    )(x, prepped["w1"], prepped["b1"], prepped["w2"], prepped["b2"],
      prepped["w3"], prepped["b3"])
    # TODO(synk): layer_norm=True branch (LayerNorm(out_dim, affine=False) + ReLU)
    # of the PyTorch module is not implemented; module default is layer_norm=False.


# ----------------------------- init & reference -----------------------------

def xavier_uniform(key, fan_in, fan_out, gain):
    # torch.nn.init.xavier_uniform_: bound = gain * sqrt(6 / (fan_in + fan_out))
    bound = gain * math.sqrt(6.0 / (fan_in + fan_out))
    return jax.random.uniform(key, (fan_in, fan_out), jnp.float32,
                              minval=-bound, maxval=bound)


def init_mlp_params(key, in_dim, out_dim, hidden_dim=64):
    gain = math.sqrt(2.0)  # nn.init.calculate_gain('relu')
    k1, k2, k3 = jax.random.split(key, 3)
    return {
        "w1": xavier_uniform(k1, in_dim, hidden_dim, gain),
        "b1": jnp.full((1, hidden_dim), 0.01, jnp.float32),
        "w2": xavier_uniform(k2, hidden_dim, hidden_dim, gain),
        "b2": jnp.full((1, hidden_dim), 0.01, jnp.float32),
        "w3": xavier_uniform(k3, hidden_dim, out_dim, gain),
        "b3": jnp.full((1, out_dim), 0.01, jnp.float32),
    }


def reference_forward(x, params, use_bf16):
    """Pure-JAX reference with the same operand quantization as the kernel."""
    cdt = jnp.bfloat16 if use_bf16 else jnp.float32
    prec = None if use_bf16 else jax.lax.Precision.HIGHEST

    def dot(a, b):
        return jnp.dot(a.astype(cdt), b.astype(cdt),
                       preferred_element_type=jnp.float32, precision=prec)

    h1 = jnp.maximum(dot(x, params["w1"]) + params["b1"], 0.0)
    h2 = jnp.maximum(dot(h1, params["w2"]) + params["b2"], 0.0)
    return dot(h2, params["w3"]) + params["b3"]


if __name__ == "__main__":
    key = jax.random.PRNGKey(0)
    k_params, k_x = jax.random.split(key)

    batch, in_dim, hidden_dim, out_dim = 64, 16, 64, 8
    params = init_mlp_params(k_params, in_dim, out_dim, hidden_dim)
    x = jax.random.normal(k_x, (batch, in_dim), jnp.float32)

    # bf16-operand path (one-time param prep, hoisted out of the call path).
    prepped_bf16 = prepare_params(params, use_bf16=True)
    out_bf16 = jax.block_until_ready(mlp_forward(x, prepped_bf16))
    assert out_bf16.shape == (batch, out_dim)
    ref_q = reference_forward(x, params, use_bf16=True)
    assert jnp.allclose(out_bf16, ref_q, atol=2e-3, rtol=2e-3), \
        float(jnp.max(jnp.abs(out_bf16 - ref_q)))

    # f32-operand path (exact module semantics).
    prepped_f32 = prepare_params(params, use_bf16=False)
    out_f32 = jax.block_until_ready(mlp_forward(x, prepped_f32))
    ref_f32 = reference_forward(x, params, use_bf16=False)
    assert out_f32.shape == (batch, out_dim)
    assert jnp.allclose(out_f32, ref_f32, atol=1e-3, rtol=1e-3), \
        float(jnp.max(jnp.abs(out_f32 - ref_f32)))

    # Non-divisible batch (exercises the partial last tile / masked writeback).
    x_odd = jax.random.normal(jax.random.PRNGKey(1), (50, in_dim), jnp.float32)
    out_odd = jax.block_until_ready(mlp_forward(x_odd, prepped_f32))
    ref_odd = reference_forward(x_odd, params, use_bf16=False)
    assert out_odd.shape == (50, out_dim)
    assert jnp.allclose(out_odd, ref_odd, atol=1e-3, rtol=1e-3), \
        float(jnp.max(jnp.abs(out_odd - ref_odd)))

    print("KERNEL_OK")
</pallas_src>

<mosaic_0001>
module attributes {stable_mosaic.version = 11 : i64} {
  func.func @mlp_kernel(%arg0: i32, %arg1: memref<32x16xf32, #tpu.memory_space<vmem>>, %arg2: memref<16x128xbf16, #tpu.memory_space<vmem>>, %arg3: memref<1x128xf32, #tpu.memory_space<vmem>>, %arg4: memref<128x128xbf16, #tpu.memory_space<vmem>>, %arg5: memref<1x128xf32, #tpu.memory_space<vmem>>, %arg6: memref<128x8xbf16, #tpu.memory_space<vmem>>, %arg7: memref<1x8xf32, #tpu.memory_space<vmem>>, %arg8: memref<32x8xf32, #tpu.memory_space<vmem>>) attributes {dimension_semantics = [#tpu.dimension_semantics<parallel>], iteration_bounds = array<i64: 2>, scalar_prefetch = 0 : i64, scratch_operands = 0 : i64, tpu.core_type = #tpu.core_type<tc>, window_params = [{transform_indices = @transform_0, window_bounds = array<i64: 32, 16>}, {pipeline_mode = #tpu.pipeline_mode<synchronous>, transform_indices = @transform_1, window_bounds = array<i64: 16, 128>}, {pipeline_mode = #tpu.pipeline_mode<synchronous>, transform_indices = @transform_2, window_bounds = array<i64: 1, 128>}, {pipeline_mode = #tpu.pipeline_mode<synchronous>, transform_indices = @transform_3, window_bounds = array<i64: 128, 128>}, {pipeline_mode = #tpu.pipeline_mode<synchronous>, transform_indices = @transform_4, window_bounds = array<i64: 1, 128>}, {pipeline_mode = #tpu.pipeline_mode<synchronous>, transform_indices = @transform_5, window_bounds = array<i64: 128, 8>}, {pipeline_mode = #tpu.pipeline_mode<synchronous>, transform_indices = @transform_6, window_bounds = array<i64: 1, 8>}, {transform_indices = @transform_7, window_bounds = array<i64: 32, 8>}]} {
    %c0 = arith.constant 0 : index
    %c0_0 = arith.constant 0 : index
    %0 = vector.load %arg1[%c0, %c0_0] : memref<32x16xf32, #tpu.memory_space<vmem>>, vector<32x16xf32>
    %1 = arith.truncf %0 : vector<32x16xf32> to vector<32x16xbf16>
    %c0_1 = arith.constant 0 : index
    %c0_2 = arith.constant 0 : index
    %2 = vector.load %arg2[%c0_1, %c0_2] : memref<16x128xbf16, #tpu.memory_space<vmem>>, vector<16x128xbf16>
    %cst = arith.constant dense<0.000000e+00> : vector<32x128xf32>
    %3 = tpu.matmul %1, %2, %cst {dimension_numbers = #tpu.dot_dimension_numbers<[1], [0], [0], [1], [0, 0, 1, 1], [], []>} : vector<32x16xbf16>, vector<16x128xbf16>, vector<32x128xf32> -> vector<32x128xf32>
    %c0_3 = arith.constant 0 : index
    %c0_4 = arith.constant 0 : index
    %4 = vector.load %arg3[%c0_3, %c0_4] : memref<1x128xf32, #tpu.memory_space<vmem>>, vector<1x128xf32>
    %5 = vector.broadcast %4 : vector<1x128xf32> to vector<32x128xf32>
    %6 = arith.addf %3, %5 : vector<32x128xf32>
    %cst_5 = arith.constant 0.000000e+00 : f32
    %7 = vector.broadcast %cst_5 : f32 to vector<32x128xf32>
    %8 = arith.maximumf %6, %7 : vector<32x128xf32>
    %9 = arith.truncf %8 : vector<32x128xf32> to vector<32x128xbf16>
    %c0_6 = arith.constant 0 : index
    %c0_7 = arith.constant 0 : index
    %10 = vector.load %arg4[%c0_6, %c0_7] : memref<128x128xbf16, #tpu.memory_space<vmem>>, vector<128x128xbf16>
    %cst_8 = arith.constant dense<0.000000e+00> : vector<32x128xf32>
    %11 = tpu.matmul %9, %10, %cst_8 {dimension_numbers = #tpu.dot_dimension_numbers<[1], [0], [0], [1], [0, 0, 1, 1], [], []>} : vector<32x128xbf16>, vector<128x128xbf16>, vector<32x128xf32> -> vector<32x128xf32>
    %c0_9 = arith.constant 0 : index
    %c0_10 = arith.constant 0 : index
    %12 = vector.load %arg5[%c0_9, %c0_10] : memref<1x128xf32, #tpu.memory_space<vmem>>, vector<1x128xf32>
    %13 = vector.broadcast %12 : vector<1x128xf32> to vector<32x128xf32>
    %14 = arith.addf %11, %13 : vector<32x128xf32>
    %cst_11 = arith.constant 0.000000e+00 : f32
    %15 = vector.broadcast %cst_11 : f32 to vector<32x128xf32>
    %16 = arith.maximumf %14, %15 : vector<32x128xf32>
    %17 = arith.truncf %16 : vector<32x128xf32> to vector<32x128xbf16>
    %c0_12 = arith.constant 0 : index
    %c0_13 = arith.constant 0 : index
    %18 = vector.load %arg6[%c0_12, %c0_13] : memref<128x8xbf16, #tpu.memory_space<vmem>>, vector<128x8xbf16>
    %cst_14 = arith.constant dense<0.000000e+00> : vector<32x8xf32>
    %19 = tpu.matmul %17, %18, %cst_14 {dimension_numbers = #tpu.dot_dimension_numbers<[1], [0], [0], [1], [0, 0, 1, 1], [], []>} : vector<32x128xbf16>, vector<128x8xbf16>, vector<32x8xf32> -> vector<32x8xf32>
    %c0_15 = arith.constant 0 : index
    %c0_16 = arith.constant 0 : index
    %20 = vector.load %arg7[%c0_15, %c0_16] : memref<1x8xf32, #tpu.memory_space<vmem>>, vector<1x8xf32>
    %21 = vector.broadcast %20 : vector<1x8xf32> to vector<32x8xf32>
    %22 = arith.addf %19, %21 : vector<32x8xf32>
    %c0_17 = arith.constant 0 : index
    %c0_18 = arith.constant 0 : index
    %23 = vector.load %arg8[%c0_17, %c0_18] : memref<32x8xf32, #tpu.memory_space<vmem>>, vector<32x8xf32>
    tpu.vector_store %arg8[%c0_17, %c0_18], %22 {strides = array<i32>} : memref<32x8xf32, #tpu.memory_space<vmem>>, vector<32x8xf32>,
    return
  }
  func.func @transform_0(%arg0: i32) -> (i32, i32) {
    %c0_i32 = arith.constant 0 : i32
    %c0_i32_0 = arith.constant 0 : i32
    return %arg0, %c0_i32 : i32, i32
  }
  func.func @transform_1(%arg0: i32) -> (i32, i32) {
    %c0_i32 = arith.constant 0 : i32
    %c0_i32_0 = arith.constant 0 : i32
    %c0_i32_1 = arith.constant 0 : i32
    return %c0_i32, %c0_i32_0 : i32, i32
  }
  func.func @transform_2(%arg0: i32) -> (i32, i32) {
    %c0_i32 = arith.constant 0 : i32
    %c0_i32_0 = arith.constant 0 : i32
    %c0_i32_1 = arith.constant 0 : i32
    return %c0_i32, %c0_i32_0 : i32, i32
  }
  func.func @transform_3(%arg0: i32) -> (i32, i32) {
    %c0_i32 = arith.constant 0 : i32
    %c0_i32_0 = arith.constant 0 : i32
    %c0_i32_1 = arith.constant 0 : i32
    return %c0_i32, %c0_i32_0 : i32, i32
  }
  func.func @transform_4(%arg0: i32) -> (i32, i32) {
    %c0_i32 = arith.constant 0 : i32
    %c0_i32_0 = arith.constant 0 : i32
    %c0_i32_1 = arith.constant 0 : i32
    return %c0_i32, %c0_i32_0 : i32, i32
  }
  func.func @transform_5(%arg0: i32) -> (i32, i32) {
    %c0_i32 = arith.constant 0 : i32
    %c0_i32_0 = arith.constant 0 : i32
    %c0_i32_1 = arith.constant 0 : i32
    return %c0_i32, %c0_i32_0 : i32, i32
  }
  func.func @transform_6(%arg0: i32) -> (i32, i32) {
    %c0_i32 = arith.constant 0 : i32
    %c0_i32_0 = arith.constant 0 : i32
    %c0_i32_1 = arith.constant 0 : i32
    return %c0_i32, %c0_i32_0 : i32, i32
  }
  func.func @transform_7(%arg0: i32) -> (i32, i32) {
    %c0_i32 = arith.constant 0 : i32
    %c0_i32_0 = arith.constant 0 : i32
    return %arg0, %c0_i32 : i32, i32
  }
}

</mosaic_0001>

<llo_original>
// kernel: tpu_custom_call.1
$region0: #{tpu_custom_call.1}
  #allocation0 [shape = 'u32[]', space=smem, size = 0x4, offset = 0x4, fixed_abs, tag = 'smem constant byte address 0x4 - core index']
  #allocation1 [shape = 'u32[144,128]{1,0:T(1,128)}', space=vmem, size = 0x12000, scoped, tag = 'internal scratch']
  %s0 = inlined_call_operand.vmem [shape: f32[64,16], index: 0, kind: input, shape index: {}]
  %s1 = inlined_call_operand.vmem [shape: bf16[16,128], index: 1, kind: input, shape index: {}]
  %s2 = inlined_call_operand.vmem [shape: f32[1,128], index: 2, kind: input, shape index: {}]
  %s3 = inlined_call_operand.vmem [shape: bf16[128,128], index: 3, kind: input, shape index: {}]
  %s4 = inlined_call_operand.vmem [shape: f32[1,128], index: 4, kind: input, shape index: {}]
  %s5 = inlined_call_operand.vmem [shape: bf16[128,8], index: 5, kind: input, shape index: {}]
  %s6 = inlined_call_operand.vmem [shape: f32[1,8], index: 6, kind: input, shape index: {}]
  %s7 = inlined_call_operand.vmem [shape: f32[64,8], index: 7, kind: output, shape index: {}]
  %s8 = sld [smem:[#allocation0]]
  $region61: #{tpu_custom_call.1} parent=0
    _
  %s10 = ssub.s32 1, %s8
  %s11 = scalar_select 0, %s10, %s8
  loop: start=0, step=1, limit=4
  $region2: #{tpu_custom_call.1} parent=0 // loop_pre_header
    _
  $region3: #{tpu_custom_call.1} parent=0 // loop_header
    %s13 = sphi 0, %s17
    %p14 = scmp.ge.s32.totalorder %s13, 4
    %s23 = sphi 0, %s25
    %s26 = sphi 0, %s23
    %s27 = sphi 0, %s26
    %s43 = sphi 0, %s27
    %s47 = sphi 0, %s47
    %s49 = sphi 0, %s47
    %s50 = sphi 0, %s49
    %s64 = sphi 0, %s50
    %s68 = sphi 0, %s68
    %s70 = sphi 0, %s68
    %s71 = sphi 0, %s70
    %s85 = sphi 0, %s71
    %s89 = sphi 0, %s89
    %s91 = sphi 0, %s89
    %s92 = sphi 0, %s91
    %s106 = sphi 0, %s92
    %s110 = sphi 0, %s110
    %s112 = sphi 0, %s110
    %s113 = sphi 0, %s112
    %s127 = sphi 0, %s113
    %s131 = sphi 0, %s131
    %s133 = sphi 0, %s131
    %s134 = sphi 0, %s133
    %s148 = sphi 0, %s134
    %s152 = sphi 0, %s152
    %s154 = sphi 0, %s152
    %s155 = sphi 0, %s154
    %s169 = sphi 0, %s155
    %s175 = sphi 0, %s177
    %s178 = sphi 0, %s175
    %s179 = sphi 0, %s178
    %s195 = sphi 0, %s179
  $region4: #{tpu_custom_call.1} parent=0 // loop_header_branch
    %16 = sbr.rel (%p14) target = $region8
  $region5: #{tpu_custom_call.1} parent=0 // loop_body
    %s18 = ssub.s32 %s13, 1
    %s19 = ssub.s32 %s13, 2
    %s20 = sadd.s32 %s13, 1
    %s21 = ssub.s32 %s13, %s20
    %p22 = scmp.eq.s32.totalorder %s21, 0
    %s24 = sadd.s32 %s23, 1
    %s25 = scalar_select %p22, %s23, %s24
    %p28 = pneg %p22
    %p29 = scmp.eq.s32.totalorder %s13, 1
    %p30 = por %p28, %p29
    %p31 = scmp.ne.s32.totalorder %s23, %s26
    %p32 = scmp.eq.s32.totalorder %s13, 0
    %p33 = por %p31, %p32
    %p34 = scmp.ne.s32.totalorder %s23, %s26
    %p35 = scmp.eq.s32.totalorder %s18, 1
    %p36 = por %p34, %p35
    %p37 = scmp.ne.s32.totalorder %s26, %s27
    %p38 = scmp.eq.s32.totalorder %s18, 0
    %p39 = por %p37, %p38
    %p40 = scmp.ne.s32.totalorder %s26, %s27
    %p41 = scmp.eq.s32.totalorder %s19, 1
    %p42 = por %p40, %p41
    %p44 = scmp.ne.s32.totalorder %s27, %s43
    %p45 = scmp.eq.s32.totalorder %s19, 0
    %p46 = por %p44, %p45
    %s48 = sadd.s32 %s47, 1
    %p51 = scmp.eq.s32.totalorder %s13, 1
    %p52 = scmp.ne.s32.totalorder %s47, %s49
    %p53 = scmp.eq.s32.totalorder %s13, 0
    %p54 = por %p52, %p53
    %p55 = scmp.ne.s32.totalorder %s47, %s49
    %p56 = scmp.eq.s32.totalorder %s18, 1
    %p57 = por %p55, %p56
    %p58 = scmp.ne.s32.totalorder %s49, %s50
    %p59 = scmp.eq.s32.totalorder %s18, 0
    %p60 = por %p58, %p59
    %p61 = scmp.ne.s32.totalorder %s49, %s50
    %p62 = scmp.eq.s32.totalorder %s19, 1
    %p63 = por %p61, %p62
    %p65 = scmp.ne.s32.totalorder %s50, %s64
    %p66 = scmp.eq.s32.totalorder %s19, 0
    %p67 = por %p65, %p66
    %s69 = sadd.s32 %s68, 1
    %p72 = scmp.eq.s32.totalorder %s13, 1
    %p73 = scmp.ne.s32.totalorder %s68, %s70
    %p74 = scmp.eq.s32.totalorder %s13, 0
    %p75 = por %p73, %p74
    %p76 = scmp.ne.s32.totalorder %s68, %s70
    %p77 = scmp.eq.s32.totalorder %s18, 1
    %p78 = por %p76, %p77
    %p79 = scmp.ne.s32.totalorder %s70, %s71
    %p80 = scmp.eq.s32.totalorder %s18, 0
    %p81 = por %p79, %p80
    %p82 = scmp.ne.s32.totalorder %s70, %s71
    %p83 = scmp.eq.s32.totalorder %s19, 1
    %p84 = por %p82, %p83
    %p86 = scmp.ne.s32.totalorder %s71, %s85
    %p87 = scmp.eq.s32.totalorder %s19, 0
    %p88 = por %p86, %p87
    %s90 = sadd.s32 %s89, 1
    %p93 = scmp.eq.s32.totalorder %s13, 1
    %p94 = scmp.ne.s32.totalorder %s89, %s91
    %p95 = scmp.eq.s32.totalorder %s13, 0
    %p96 = por %p94, %p95
    %p97 = scmp.ne.s32.totalorder %s89, %s91
    %p98 = scmp.eq.s32.totalorder %s18, 1
    %p99 = por %p97, %p98
    %p100 = scmp.ne.s32.totalorder %s91, %s92
    %p101 = scmp.eq.s32.totalorder %s18, 0
    %p102 = por %p100, %p101
    %p103 = scmp.ne.s32.totalorder %s91, %s92
    %p104 = scmp.eq.s32.totalorder %s19, 1
    %p105 = por %p103, %p104
    %p107 = scmp.ne.s32.totalorder %s92, %s106
    %p108 = scmp.eq.s32.totalorder %s19, 0
    %p109 = por %p107, %p108
    %s111 = sadd.s32 %s110, 1
    %p114 = scmp.eq.s32.totalorder %s13, 1
    %p115 = scmp.ne.s32.totalorder %s110, %s112
    %p116 = scmp.eq.s32.totalorder %s13, 0
    %p117 = por %p115, %p116
    %p118 = scmp.ne.s32.totalorder %s110, %s112
    %p119 = scmp.eq.s32.totalorder %s18, 1
    %p120 = por %p118, %p119
    %p121 = scmp.ne.s32.totalorder %s112, %s113
    %p122 = scmp.eq.s32.totalorder %s18, 0
    %p123 = por %p121, %p122
    %p124 = scmp.ne.s32.totalorder %s112, %s113
    %p125 = scmp.eq.s32.totalorder %s19, 1
    %p126 = por %p124, %p125
    %p128 = scmp.ne.s32.totalorder %s113, %s127
    %p129 = scmp.eq.s32.totalorder %s19, 0
    %p130 = por %p128, %p129
    %s132 = sadd.s32 %s131, 1
    %p135 = scmp.eq.s32.totalorder %s13, 1
    %p136 = scmp.ne.s32.totalorder %s131, %s133
    %p137 = scmp.eq.s32.totalorder %s13, 0
    %p138 = por %p136, %p137
    %p139 = scmp.ne.s32.totalorder %s131, %s133
    %p140 = scmp.eq.s32.totalorder %s18, 1
    %p141 = por %p139, %p140
    %p142 = scmp.ne.s32.totalorder %s133, %s134
    %p143 = scmp.eq.s32.totalorder %s18, 0
    %p144 = por %p142, %p143
    %p145 = scmp.ne.s32.totalorder %s133, %s134
    %p146 = scmp.eq.s32.totalorder %s19, 1
    %p147 = por %p145, %p146
    %p149 = scmp.ne.s32.totalorder %s134, %s148
    %p150 = scmp.eq.s32.totalorder %s19, 0
    %p151 = por %p149, %p150
    %s153 = sadd.s32 %s152, 1
    %p156 = scmp.eq.s32.totalorder %s13, 1
    %p157 = scmp.ne.s32.totalorder %s152, %s154
    %p158 = scmp.eq.s32.totalorder %s13, 0
    %p159 = por %p157, %p158
    %p160 = scmp.ne.s32.totalorder %s152, %s154
    %p161 = scmp.eq.s32.totalorder %s18, 1
    %p162 = por %p160, %p161
    %p163 = scmp.ne.s32.totalorder %s154, %s155
    %p164 = scmp.eq.s32.totalorder %s18, 0
    %p165 = por %p163, %p164
    %p166 = scmp.ne.s32.totalorder %s154, %s155
    %p167 = scmp.eq.s32.totalorder %s19, 1
    %p168 = por %p166, %p167
    %p170 = scmp.ne.s32.totalorder %s155, %s169
    %p171 = scmp.eq.s32.totalorder %s19, 0
    %p172 = por %p170, %p171
    %s173 = ssub.s32 %s13, %s20
    %p174 = scmp.eq.s32.totalorder %s173, 0
    %s176 = sadd.s32 %s175, 1
    %s177 = scalar_select %p174, %s175, %s176
    %p180 = pneg %p174
    %p181 = scmp.eq.s32.totalorder %s13, 1
    %p182 = por %p180, %p181
    %p183 = scmp.ne.s32.totalorder %s175, %s178
    %p184 = scmp.eq.s32.totalorder %s13, 0
    %p185 = por %p183, %p184
    %p186 = scmp.ne.s32.totalorder %s175, %s178
    %p187 = scmp.eq.s32.totalorder %s18, 1
    %p188 = por %p186, %p187
    %p189 = scmp.ne.s32.totalorder %s178, %s179
    %p190 = scmp.eq.s32.totalorder %s18, 0
    %p191 = por %p189, %p190
    %p192 = scmp.ne.s32.totalorder %s178, %s179
    %p193 = scmp.eq.s32.totalorder %s19, 1
    %p194 = por %p192, %p193
    %p196 = scmp.ne.s32.totalorder %s179, %s195
    %p197 = scmp.eq.s32.totalorder %s19, 0
    %p198 = por %p196, %p197
    %p199 = scmp.le.s32.totalorder 1, %s13
    %p200 = scmp.lt.s32.totalorder %s13, 3
    %p201 = pnand %p199, %p200
    %p202 = pneg %p201
    // Predicated region
    $region9: #{tpu_custom_call.1} parent=5 // pred_check
      _
    $region10: #{tpu_custom_call.1} parent=5 // pred_check_branch
      %204 = sbr.rel (%p201) target = $region12
    $region11: #{tpu_custom_call.1} parent=5 // pred_region
      %s205 = ssub.s32 %s13, 1
      // Predicated region
      $region13: #{tpu_custom_call.1} parent=11 // pred_check
        %p206 = pneg %p60
      $region14: #{tpu_custom_call.1} parent=11 // pred_check_branch
        %208 = sbr.rel (%p206) target = $region16
      $region15: #{tpu_custom_call.1} parent=11 // pred_region
        _
      $region16: #{tpu_custom_call.1} parent=11 // pred_fallthru
        _
      // Predicated region
      $region17: #{tpu_custom_call.1} parent=11 // pred_check
        %p209 = pneg %p81
      $region18: #{tpu_custom_call.1} parent=11 // pred_check_branch
        %211 = sbr.rel (%p209) target = $region20
      $region19: #{tpu_custom_call.1} parent=11 // pred_region
        _
      $region20: #{tpu_custom_call.1} parent=11 // pred_fallthru
        _
      // Predicated region
      $region21: #{tpu_custom_call.1} parent=11 // pred_check
        %p212 = pneg %p102
      $region22: #{tpu_custom_call.1} parent=11 // pred_check_branch
        %214 = sbr.rel (%p212) target = $region24
      $region23: #{tpu_custom_call.1} parent=11 // pred_region
        _
      $region24: #{tpu_custom_call.1} parent=11 // pred_fallthru
        _
      // Predicated region
      $region25: #{tpu_custom_call.1} parent=11 // pred_check
        %p215 = pneg %p123
      $region26: #{tpu_custom_call.1} parent=11 // pred_check_branch
        %217 = sbr.rel (%p215) target = $region28
      $region27: #{tpu_custom_call.1} parent=11 // pred_region
        _
      $region28: #{tpu_custom_call.1} parent=11 // pred_fallthru
        _
      // Predicated region
      $region29: #{tpu_custom_call.1} parent=11 // pred_check
        %p218 = pneg %p144
      $region30: #{tpu_custom_call.1} parent=11 // pred_check_branch
        %220 = sbr.rel (%p218) target = $region32
      $region31: #{tpu_custom_call.1} parent=11 // pred_region
        _
      $region32: #{tpu_custom_call.1} parent=11 // pred_fallthru
        _
      // Predicated region
      $region33: #{tpu_custom_call.1} parent=11 // pred_check
        %p221 = pneg %p165
      $region34: #{tpu_custom_call.1} parent=11 // pred_check_branch
        %223 = sbr.rel (%p221) target = $region36
      $region35: #{tpu_custom_call.1} parent=11 // pred_region
        _
      $region36: #{tpu_custom_call.1} parent=11 // pred_fallthru
        _
    $region12: #{tpu_custom_call.1} parent=5 // pred_fallthru
      _
    %p224 = scmp.lt.s32.totalorder %s13, 2
    // Predicated region
    $region37: #{tpu_custom_call.1} parent=5 // pred_check
      %p225 = pneg %p224
    $region38: #{tpu_custom_call.1} parent=5 // pred_check_branch
      %227 = sbr.rel (%p225) target = $region40
    $region39: #{tpu_custom_call.1} parent=5 // pred_region
      // Predicated region
      $region41: #{tpu_custom_call.1} parent=39 // pred_check
        %p228 = pneg %p33
      $region42: #{tpu_custom_call.1} parent=39 // pred_check_branch
        %230 = sbr.rel (%p228) target = $region44
      $region43: #{tpu_custom_call.1} parent=39 // pred_region
        %s231 = smul.u32 4, %s13
        %p232 = scmp.lt.s32.totalorder %s231, 7
        %s233 = scalar_select %p232, %s231, 7
        %s234 = smul.addr %s233, 8
        %s235 = scalar_lea.vmem %s0, %s234
        %s236 = smul.u32 4, %s13
      $region44: #{tpu_custom_call.1} parent=39 // pred_fallthru
        _
    $region40: #{tpu_custom_call.1} parent=5 // pred_fallthru
      _
    %p237 = scmp.le.s32.totalorder 1, %s13
    %p238 = scmp.lt.s32.totalorder %s13, 3
    %p239 = pnand %p237, %p238
    %p240 = pneg %p239
    // Predicated region
    $region45: #{tpu_custom_call.1} parent=5 // pred_check
      _
    $region46: #{tpu_custom_call.1} parent=5 // pred_check_branch
      %242 = sbr.rel (%p239) target = $region48
    $region47: #{tpu_custom_call.1} parent=5 // pred_region
      %s243 = ssub.s32 %s13, 1
      %s244 = smul.u32 4, %s18
      %p245 = scmp.lt.s32.totalorder %s244, 7
      %s246 = scalar_select %p245, %s244, 7
      %s247 = smul.addr %s246, 8
      %s248 = scalar_lea.vmem %s0, %s247
      %p249 = pneg %p39
      %p250 = pneg %p36
      %p251 = pneg %p60
      %p252 = pneg %p57
      %p253 = pneg %p81
      %p254 = pneg %p78
      %p255 = pneg %p102
      %p256 = pneg %p99
      %p257 = pneg %p123
      %p258 = pneg %p120
      %p259 = pneg %p144
      %p260 = pneg %p141
      %p261 = pneg %p165
      %p262 = pneg %p162
      %p263 = pneg %p191
      %p264 = pneg %p188
      %s265 = smul.u32 4, %s18
      %p266 = scmp.lt.s32.totalorder %s265, 7
      %s267 = scalar_select %p266, %s265, 7
      %s268 = smul.addr %s267, 8
      %s269 = scalar_lea.vmem %s7, %s268
      %s270 = smul.u32 4, %s18
      %p271 = scmp.lt.s32.totalorder %s270, 7
      %s272 = scalar_select %p271, %s270, 7
      %s273 = smul.addr %s272, 8
      %s274 = scalar_lea.vmem %s0, %s273
      %s275 = smul.u32 4, %s18
      %s276 = smul.u32 4, %s18
      %p277 = scmp.lt.s32.totalorder %s276, 7
      %s278 = scalar_select %p277, %s276, 7
      %s279 = smul.addr %s278, 8
      %s280 = scalar_lea.vmem %s7, %s279
      %s281 = smul.u32 4, %s18
      %v283 = vld [vmem:[%s274] sm:$0xff]
      %v284 = vld [vmem:[%s274 + $0x8] sm:$0xff]
      %v285 = vld [vmem:[%s274 + $0x10] sm:$0xff]
      %v286 = vld [vmem:[%s274 + $0x18] sm:$0xff]
      %v287 = vpack.c.bf16 %v284, %v283
      %v288 = vpack.c.bf16 %v286, %v285
      %v289 = vld [vmem:[%s1] sm:$0xf]
      %v290 = vld [vmem:[%s1 + $0x4] sm:$0xf]
      %v291 = vld [vmem:[%s2] sm:$0x1]
      %v293 = vlaneseq
      %v294 = vshrl.u32 %v293, 7
      %v295 = vsub.s32 0, %v294
      %v296 = vrot.slane %v291, %v295
      %v300 = vunpack.c.l.b16 %v289
      %v301 = vunpack.c.l.b16 %v290
      %v302 = vpack.c.b16 %v301, %v300
      %vm304 = vcmask 130048
      %v306 = vsel %vm304, %v287, 0
      %v309 = vsel %vm304, %v288, 0
      %311 = vmatprep.subr.bf16.mxu0 0
      %312 = vmatpush1.bf16.msra.mxu0 %v302
      %313 = vmatprep.subr.bf16.mxu0 0
      %314 = vmatpush1.bf16.msra.mxu0 0
      %315 = vmatprep.subr.bf16.mxu0 0
      %316 = vmatpush1.bf16.msra.mxu0 0
      %317 = vmatprep.subr.bf16.mxu0 0
      %318 = vmatpush1.bf16.msra.mxu0 0
      %319 = vmatprep.subr.bf16.mxu0 0
      %320 = vmatpush1.bf16.msra.mxu0 0
      %321 = vmatprep.subr.bf16.mxu0 0
      %322 = vmatpush1.bf16.msra.mxu0 0
      %323 = vmatprep.subr.bf16.mxu0 0
      %324 = vmatpush1.bf16.msra.mxu0 0
      %325 = vmatprep.subr.bf16.mxu0 0
      %326 = vmatpush1.bf16.msra.mxu0 0
      %327 = vmatprep.subr.bf16.mxu0 0
      %328 = vmatpush1.bf16.msra.mxu0 0
      %329 = vmatprep.subr.bf16.mxu0 0
      %330 = vmatpush1.bf16.msra.mxu0 0
      %331 = vmatprep.subr.bf16.mxu0 0
      %332 = vmatpush1.bf16.msra.mxu0 0
      %333 = vmatprep.subr.bf16.mxu0 0
      %334 = vmatpush1.bf16.msra.mxu0 0
      %335 = vmatprep.subr.bf16.mxu0 0
      %336 = vmatpush1.bf16.msra.mxu0 0
      %337 = vmatprep.subr.bf16.mxu0 0
      %338 = vmatpush1.bf16.msra.mxu0 0
      %339 = vmatprep.subr.bf16.mxu0 0
      %340 = vmatpush1.bf16.msra.mxu0 0
      %341 = vmatprep.subr.bf16.mxu0 0
      %342 = vmatpush1.bf16.msra.mxu0 0
      %343 = vmatprep.mubr.bf16.mxu0 0
      %344 = vmatmul.mubr.bf16.gmra.mrb[0].mxu0 %v306
      %v345 = vpop.f32.mrb[0].mxu0
      %v346 = vadd.f32 %v296, %v345
      %v347 = vpop.f32.mrb[0].mxu0
      %v348 = vpop.f32.mrb[0].mxu0
      %v349 = vadd.f32 %v296, %v348
      %v350 = vpop.f32.mrb[0].mxu0
      %351 = vmatprep.mubr.bf16.mxu0 0
      %352 = vmatmul.mubr.bf16.gmra.mrb[0].mxu0 %v309
      %v353 = vpop.f32.mrb[0].mxu0
      %v354 = vadd.f32 %v296, %v353
      %v355 = vpop.f32.mrb[0].mxu0
      %v356 = vpop.f32.mrb[0].mxu0
      %v357 = vadd.f32 %v296, %v356
      %v358 = vpop.f32.mrb[0].mxu0
      %359 = vdwg.mxu0
      %v360 = vmax.f32 %v346, 0.0
      %v361 = vmax.f32 %v349, 0.0
      %v362 = vmax.f32 %v354, 0.0
      %v363 = vmax.f32 %v357, 0.0
      %v364 = vpack.c.bf16 %v361, %v360
      %v365 = vpack.c.bf16 %v363, %v362
      %v366 = vld [vmem:[%s3] sm:$0xf]
      %v367 = vld [vmem:[%s3 + $0x4] sm:$0xf]
      %v368 = vld [vmem:[%s3 + $0x8] sm:$0xf]
      %v369 = vld [vmem:[%s3 + $0xc] sm:$0xf]
      %v370 = vld [vmem:[%s3 + $0x10] sm:$0xf]
      %v371 = vld [vmem:[%s3 + $0x14] sm:$0xf]
      %v372 = vld [vmem:[%s3 + $0x18] sm:$0xf]
      %v373 = vld [vmem:[%s3 + $0x1c] sm:$0xf]
      %v374 = vld [vmem:[%s3 + $0x20] sm:$0xf]
      %v375 = vld [vmem:[%s3 + $0x24] sm:$0xf]
      %v376 = vld [vmem:[%s3 + $0x28] sm:$0xf]
      %v377 = vld [vmem:[%s3 + $0x2c] sm:$0xf]
      %v378 = vld [vmem:[%s3 + $0x30] sm:$0xf]
      %v379 = vld [vmem:[%s3 + $0x34] sm:$0xf]
      %v380 = vld [vmem:[%s3 + $0x38] sm:$0xf]
      %v381 = vld [vmem:[%s3 + $0x3c] sm:$0xf]
      %v382 = vld [vmem:[%s4] sm:$0x1]
      %v384 = vlaneseq
      %v385 = vshrl.u32 %v384, 7
      %v386 = vsub.s32 0, %v385
      %v387 = vrot.slane %v382, %v386
      %v405 = vunpack.c.l.b16 %v366
      %v406 = vunpack.c.l.b16 %v367
      %v407 = vunpack.c.l.b16 %v368
      %v408 = vunpack.c.l.b16 %v369
      %v409 = vunpack.c.l.b16 %v370
      %v410 = vunpack.c.l.b16 %v371
      %v411 = vunpack.c.l.b16 %v372
      %v412 = vunpack.c.l.b16 %v373
      %v413 = vunpack.c.l.b16 %v374
      %v414 = vunpack.c.l.b16 %v375
      %v415 = vunpack.c.l.b16 %v376
      %v416 = vunpack.c.l.b16 %v377
      %v417 = vunpack.c.l.b16 %v378
      %v418 = vunpack.c.l.b16 %v379
      %v419 = vunpack.c.l.b16 %v380
      %v420 = vunpack.c.l.b16 %v381
      %v421 = vpack.c.b16 %v406, %v405
      %v422 = vpack.c.b16 %v408, %v407
      %v423 = vpack.c.b16 %v410, %v409
      %v424 = vpack.c.b16 %v412, %v411
      %v425 = vpack.c.b16 %v414, %v413
      %v426 = vpack.c.b16 %v416, %v415
      %v427 = vpack.c.b16 %v418, %v417
      %v428 = vpack.c.b16 %v420, %v419
      %437 = vmatprep.subr.bf16.mxu0 0
      %438 = vmatpush1.bf16.msra.mxu0 %v421
      %439 = vmatprep.subr.bf16.mxu0 0
      %440 = vmatpush1.bf16.msra.mxu0 %v422
      %441 = vmatprep.subr.bf16.mxu0 0
      %442 = vmatpush1.bf16.msra.mxu0 %v423
      %443 = vmatprep.subr.bf16.mxu0 0
      %444 = vmatpush1.bf16.msra.mxu0 %v424
      %445 = vmatprep.subr.bf16.mxu0 0
      %446 = vmatpush1.bf16.msra.mxu0 %v425
      %447 = vmatprep.subr.bf16.mxu0 0
      %448 = vmatpush1.bf16.msra.mxu0 %v426
      %449 = vmatprep.subr.bf16.mxu0 0
      %450 = vmatpush1.bf16.msra.mxu0 %v427
      %451 = vmatprep.subr.bf16.mxu0 0
      %452 = vmatpush1.bf16.msra.mxu0 %v428
      %453 = vmatprep.subr.bf16.mxu0 0
      %454 = vmatpush1.bf16.msra.mxu0 0
      %455 = vmatprep.subr.bf16.mxu0 0
      %456 = vmatpush1.bf16.msra.mxu0 0
      %457 = vmatprep.subr.bf16.mxu0 0
      %458 = vmatpush1.bf16.msra.mxu0 0
      %459 = vmatprep.subr.bf16.mxu0 0
      %460 = vmatpush1.bf16.msra.mxu0 0
      %461 = vmatprep.subr.bf16.mxu0 0
      %462 = vmatpush1.bf16.msra.mxu0 0
      %463 = vmatprep.subr.bf16.mxu0 0
      %464 = vmatpush1.bf16.msra.mxu0 0
      %465 = vmatprep.subr.bf16.mxu0 0
      %466 = vmatpush1.bf16.msra.mxu0 0
      %467 = vmatprep.subr.bf16.mxu0 0
      %468 = vmatpush1.bf16.msra.mxu0 0
      %469 = vmatprep.mubr.bf16.mxu0 0
      %470 = vmatmul.mubr.bf16.gmra.mrb[0].mxu0 %v364
      %v471 = vpop.f32.mrb[0].mxu0
      %v472 = vadd.f32 %v387, %v471
      %v473 = vpop.f32.mrb[0].mxu0
      %v474 = vpop.f32.mrb[0].mxu0
      %v475 = vadd.f32 %v387, %v474
      %v476 = vpop.f32.mrb[0].mxu0
      %477 = vmatprep.mubr.bf16.mxu0 0
      %478 = vmatmul.mubr.bf16.gmra.mrb[0].mxu0 %v365
      %v479 = vpop.f32.mrb[0].mxu0
      %v480 = vadd.f32 %v387, %v479
      %v481 = vpop.f32.mrb[0].mxu0
      %v482 = vpop.f32.mrb[0].mxu0
      %v483 = vadd.f32 %v387, %v482
      %v484 = vpop.f32.mrb[0].mxu0
      %485 = vdwg.mxu0
      %v486 = vmax.f32 %v472, 0.0
      %v487 = vmax.f32 %v475, 0.0
      %v488 = vmax.f32 %v480, 0.0
      %v489 = vmax.f32 %v483, 0.0
      %v490 = vpack.c.bf16 %v487, %v486
      %v491 = vpack.c.bf16 %v489, %v488
      %v492 = vld [vmem:[%s5] sm:$0xf]
      %v493 = vld [vmem:[%s5 + $0x4] sm:$0xf]
      %v494 = vld [vmem:[%s5 + $0x8] sm:$0xf]
      %v495 = vld [vmem:[%s5 + $0xc] sm:$0xf]
      %v496 = vld [vmem:[%s5 + $0x10] sm:$0xf]
      %v497 = vld [vmem:[%s5 + $0x14] sm:$0xf]
      %v498 = vld [vmem:[%s5 + $0x18] sm:$0xf]
      %v499 = vld [vmem:[%s5 + $0x1c] sm:$0xf]
      %v500 = vld [vmem:[%s5 + $0x20] sm:$0xf]
      %v501 = vld [vmem:[%s5 + $0x24] sm:$0xf]
      %v502 = vld [vmem:[%s5 + $0x28] sm:$0xf]
      %v503 = vld [vmem:[%s5 + $0x2c] sm:$0xf]
      %v504 = vld [vmem:[%s5 + $0x30] sm:$0xf]
      %v505 = vld [vmem:[%s5 + $0x34] sm:$0xf]
      %v506 = vld [vmem:[%s5 + $0x38] sm:$0xf]
      %v507 = vld [vmem:[%s5 + $0x3c] sm:$0xf]
      %v508 = vld [vmem:[%s6] sm:$0x1]
      %v510 = vlaneseq
      %v511 = vshrl.u32 %v510, 7
      %v512 = vsub.s32 0, %v511
      %v513 = vrot.slane %v508, %v512
      %v531 = vunpack.c.l.b16 %v492
      %v532 = vunpack.c.l.b16 %v493
      %v533 = vunpack.c.l.b16 %v494
      %v534 = vunpack.c.l.b16 %v495
      %v535 = vunpack.c.l.b16 %v496
      %v536 = vunpack.c.l.b16 %v497
      %v537 = vunpack.c.l.b16 %v498
      %v538 = vunpack.c.l.b16 %v499
      %v539 = vunpack.c.l.b16 %v500
      %v540 = vunpack.c.l.b16 %v501
      %v541 = vunpack.c.l.b16 %v502
      %v542 = vunpack.c.l.b16 %v503
      %v543 = vunpack.c.l.b16 %v504
      %v544 = vunpack.c.l.b16 %v505
      %v545 = vunpack.c.l.b16 %v506
      %v546 = vunpack.c.l.b16 %v507
      %v547 = vpack.c.b16 %v532, %v531
      %v548 = vpack.c.b16 %v534, %v533
      %v549 = vpack.c.b16 %v536, %v535
      %v550 = vpack.c.b16 %v538, %v537
      %v551 = vpack.c.b16 %v540, %v539
      %v552 = vpack.c.b16 %v542, %v541
      %v553 = vpack.c.b16 %v544, %v543
      %v554 = vpack.c.b16 %v546, %v545
      %563 = vmatprep.subr.bf16.mxu0 0
      %564 = vmatpush1.bf16.msra.mxu0 %v547
      %565 = vmatprep.subr.bf16.mxu0 0
      %566 = vmatpush1.bf16.msra.mxu0 %v548
      %567 = vmatprep.subr.bf16.mxu0 0
      %568 = vmatpush1.bf16.msra.mxu0 %v549
      %569 = vmatprep.subr.bf16.mxu0 0
      %570 = vmatpush1.bf16.msra.mxu0 %v550
      %571 = vmatprep.subr.bf16.mxu0 0
      %572 = vmatpush1.bf16.msra.mxu0 %v551
      %573 = vmatprep.subr.bf16.mxu0 0
      %574 = vmatpush1.bf16.msra.mxu0 %v552
      %575 = vmatprep.subr.bf16.mxu0 0
      %576 = vmatpush1.bf16.msra.mxu0 %v553
      %577 = vmatprep.subr.bf16.mxu0 0
      %578 = vmatpush1.bf16.msra.mxu0 %v554
      %579 = vmatprep.subr.bf16.mxu0 0
      %580 = vmatpush1.bf16.msra.mxu0 0
      %581 = vmatprep.subr.bf16.mxu0 0
      %582 = vmatpush1.bf16.msra.mxu0 0
      %583 = vmatprep.subr.bf16.mxu0 0
      %584 = vmatpush1.bf16.msra.mxu0 0
      %585 = vmatprep.subr.bf16.mxu0 0
      %586 = vmatpush1.bf16.msra.mxu0 0
      %587 = vmatprep.subr.bf16.mxu0 0
      %588 = vmatpush1.bf16.msra.mxu0 0
      %589 = vmatprep.subr.bf16.mxu0 0
      %590 = vmatpush1.bf16.msra.mxu0 0
      %591 = vmatprep.subr.bf16.mxu0 0
      %592 = vmatpush1.bf16.msra.mxu0 0
      %593 = vmatprep.subr.bf16.mxu0 0
      %594 = vmatpush1.bf16.msra.mxu0 0
      %595 = vmatprep.mubr.bf16.mxu0 0
      %596 = vmatmul.mubr.bf16.gmra.mrb[0].mxu0 %v490
      %v597 = vpop.f32.mrb[0].mxu0
      %v598 = vadd.f32 %v513, %v597
      %v599 = vpop.f32.mrb[0].mxu0
      %v600 = vpop.f32.mrb[0].mxu0
      %v601 = vadd.f32 %v513, %v600
      %v602 = vpop.f32.mrb[0].mxu0
      %603 = vmatprep.mubr.bf16.mxu0 0
      %604 = vmatmul.mubr.bf16.gmra.mrb[0].mxu0 %v491
      %v605 = vpop.f32.mrb[0].mxu0
      %v606 = vadd.f32 %v513, %v605
      %v607 = vpop.f32.mrb[0].mxu0
      %v608 = vpop.f32.mrb[0].mxu0
      %v609 = vadd.f32 %v513, %v608
      %v610 = vpop.f32.mrb[0].mxu0
      %611 = vdwg.mxu0
      %vm612 = vcmask 64512
      %613 = vst.msk [vmem:[%s280] sm:$0xff] %vm612, %v598
      %614 = vst.msk [vmem:[%s280 + $0x8] sm:$0xff] %vm612, %v601
      %615 = vst.msk [vmem:[%s280 + $0x10] sm:$0xff] %vm612, %v606
      %616 = vst.msk [vmem:[%s280 + $0x18] sm:$0xff] %vm612, %v609
      %s617 = smul.u32 4, %s18
      %p618 = scmp.lt.s32.totalorder %s617, 7
      %s619 = scalar_select %p618, %s617, 7
      %s620 = smul.addr %s619, 8
      %s621 = scalar_lea.vmem %s7, %s620
      // Predicated region
      $region49: #{tpu_custom_call.1} parent=47 // pred_check
        %p622 = pneg %p188
      $region50: #{tpu_custom_call.1} parent=47 // pred_check_branch
        %624 = sbr.rel (%p622) target = $region52
      $region51: #{tpu_custom_call.1} parent=47 // pred_region
        %s625 = smul.u32 4, %s18
      $region52: #{tpu_custom_call.1} parent=47 // pred_fallthru
        _
    $region48: #{tpu_custom_call.1} parent=5 // pred_fallthru
      _
    %p626 = scmp.le.s32.totalorder 2, %s13
    // Predicated region
    $region53: #{tpu_custom_call.1} parent=5 // pred_check
      %p627 = pneg %p626
    $region54: #{tpu_custom_call.1} parent=5 // pred_check_branch
      %629 = sbr.rel (%p627) target = $region56
    $region55: #{tpu_custom_call.1} parent=5 // pred_region
      %s630 = ssub.s32 %s13, 2
      // Predicated region
      $region57: #{tpu_custom_call.1} parent=55 // pred_check
        %p631 = pneg %p194
      $region58: #{tpu_custom_call.1} parent=55 // pred_check_branch
        %633 = sbr.rel (%p631) target = $region60
      $region59: #{tpu_custom_call.1} parent=55 // pred_region
        %s634 = smul.u32 4, %s19
        %p635 = scmp.lt.s32.totalorder %s634, 7
        %s636 = scalar_select %p635, %s634, 7
        %s637 = smul.addr %s636, 8
        %s638 = scalar_lea.vmem %s7, %s637
      $region60: #{tpu_custom_call.1} parent=55 // pred_fallthru
        _
    $region56: #{tpu_custom_call.1} parent=5 // pred_fallthru
      _
  $region6: #{tpu_custom_call.1} parent=0 // loop_footer
    %s17 = sadd.s32 1, %s13
  $region7: #{tpu_custom_call.1} parent=0 // loop_footer_branch
    %12 = sbr.rel target = $region3
  $region8: #{tpu_custom_call.1} parent=0 // loop_exit
    _

</llo_original>
